<compile_context>
chip_gen: v5e
topology: v5e:2x2
jax: 0.10.0
libtpu: 0.0.40
codegen_flags: <defaults>
</compile_context>

<pallas_src>
import functools

import jax
import jax.numpy as jnp
from jax.experimental import pallas as pl
from jax.experimental.pallas import tpu as pltpu


def _dice_kernel(p_ref, t_ref, inter_ref, sum_ref, inter_acc, sum_acc,
                 *, num_rows, rows_tile, need_mask):
    j = pl.program_id(1)

    @pl.when(j == 0)
    def _():
        inter_acc[...] = jnp.zeros_like(inter_acc)
        sum_acc[...] = jnp.zeros_like(sum_acc)

    # Native-dtype DMA; cast to f32 in-register (safe on v5e: no bf16 VALU).
    p = p_ref[...].astype(jnp.float32)   # (rows_tile, 128)
    t = t_ref[...].astype(jnp.float32)

    if need_mask:
        # Ragged last chunk: zero out rows past the real feature extent so
        # garbage from the partial block contributes nothing to the sums.
        row = jax.lax.broadcasted_iota(jnp.int32, (rows_tile, 128), 0)
        valid = (row + j * rows_tile) < num_rows
        p = jnp.where(valid, p, 0.0)
        t = jnp.where(valid, t, 0.0)

    # Hot path: pure VPU elementwise accumulation (no per-tile XLU reduces).
    inter_acc[...] += p * t
    sum_acc[...] += p + t

    @pl.when(j == pl.num_programs(1) - 1)
    def _():
        # One cross-lane/sublane reduction per sample, in the epilogue only.
        inter_total = jnp.sum(inter_acc[...])
        sum_total = jnp.sum(sum_acc[...])
        inter_ref[...] = jnp.broadcast_to(inter_total, (8, 128))
        sum_ref[...] = jnp.broadcast_to(sum_total, (8, 128))


@functools.partial(jax.jit, static_argnames=("target_rows",))
def dice_loss(pred, target, *, target_rows=2048):
    # Flatten each sample: matches pred.view(size, -1) in the PyTorch module.
    n = pred.shape[0]
    p2 = pred.reshape(n, -1)
    t2 = target.reshape(n, -1)
    f = p2.shape[1]

    lane = 128
    r = -(-f // lane)            # rows per sample
    f_pad = r * lane
    if f_pad != f:
        # Only needed when F is not lane-aligned (not hit by typical C*H*W).
        # Zero padding is sum-safe for intersection / pred-sum / target-sum.
        p2 = jnp.pad(p2, ((0, 0), (0, f_pad - f)))
        t2 = jnp.pad(t2, ((0, 0), (0, f_pad - f)))
    p3 = p2.reshape(n, r, lane)
    t3 = t2.reshape(n, r, lane)

    # Row-chunk tiling along the feature axis (rows_tile x 128 per block).
    if r <= target_rows:
        rows_tile = r            # single chunk == full dim (always legal)
        num_chunks = 1
        need_mask = False
    else:
        rows_tile = max(8, (min(target_rows, r) // 8) * 8)
        num_chunks = -(-r // rows_tile)
        need_mask = (num_chunks * rows_tile) != r

    kernel = functools.partial(
        _dice_kernel, num_rows=r, rows_tile=rows_tile, need_mask=need_mask)

    inter, sums = pl.pallas_call(
        kernel,
        out_shape=(
            jax.ShapeDtypeStruct((n, 8, 128), jnp.float32),
            jax.ShapeDtypeStruct((n, 8, 128), jnp.float32),
        ),
        grid_spec=pltpu.PrefetchScalarGridSpec(
            num_scalar_prefetch=0,
            grid=(n, num_chunks),
            in_specs=[
                pl.BlockSpec((None, rows_tile, lane), lambda i, j: (i, j, 0)),
                pl.BlockSpec((None, rows_tile, lane), lambda i, j: (i, j, 0)),
            ],
            out_specs=(
                pl.BlockSpec((None, 8, 128), lambda i, j: (i, 0, 0)),
                pl.BlockSpec((None, 8, 128), lambda i, j: (i, 0, 0)),
            ),
            scratch_shapes=[
                pltpu.VMEM((rows_tile, lane), jnp.float32),
                pltpu.VMEM((rows_tile, lane), jnp.float32),
            ],
        ),
        compiler_params=pltpu.CompilerParams(
            # samples: parallel (megacore on v7x); feature chunks: reduction.
            dimension_semantics=("parallel", "arbitrary"),
        ),
    )(p3, t3)

    # Final tiny epilogue in plain JAX: dice score + mean over samples.
    smooth = jnp.float32(1.0)
    inter_s = inter[:, 0, 0]
    sum_s = sums[:, 0, 0]
    dice = (2.0 * inter_s + smooth) / (sum_s + smooth)
    return jnp.float32(1.0) - jnp.sum(dice) / jnp.float32(n)


def dice_loss_ref(pred, target):
    smooth = 1.0
    n = pred.shape[0]
    p = pred.reshape(n, -1).astype(jnp.float32)
    t = target.reshape(n, -1).astype(jnp.float32)
    inter = jnp.sum(p * t, axis=1)
    score = (2.0 * inter + smooth) / (jnp.sum(p, axis=1) + jnp.sum(t, axis=1) + smooth)
    return 1.0 - jnp.sum(score) / n


if __name__ == "__main__":
    key = jax.random.PRNGKey(0)
    k1, k2 = jax.random.split(key)
    # Small segmentation-style shapes: NCHW.
    pred = jax.nn.sigmoid(jax.random.normal(k1, (2, 4, 16, 16), dtype=jnp.float32))
    target = (jax.random.uniform(k2, (2, 4, 16, 16)) > 0.5).astype(jnp.float32)

    out = dice_loss(pred, target)
    jax.block_until_ready(out)

    ref = dice_loss_ref(pred, target)
    assert jnp.allclose(out, ref, atol=1e-5, rtol=1e-5), (out, ref)
    print("KERNEL_OK")
</pallas_src>

<mosaic_0001>
module attributes {stable_mosaic.version = 11 : i64} {
  func.func @_dice_kernel(%arg0: i32, %arg1: i32, %arg2: memref<1x8x128xf32, #tpu.memory_space<vmem>>, %arg3: memref<1x8x128xf32, #tpu.memory_space<vmem>>, %arg4: memref<1x8x128xf32, #tpu.memory_space<vmem>>, %arg5: memref<1x8x128xf32, #tpu.memory_space<vmem>>, %arg6: memref<8x128xf32, #tpu.memory_space<vmem>>, %arg7: memref<8x128xf32, #tpu.memory_space<vmem>>) attributes {dimension_semantics = [#tpu.dimension_semantics<parallel>, #tpu.dimension_semantics<arbitrary>], iteration_bounds = array<i64: 2, 1>, scalar_prefetch = 0 : i64, scratch_operands = 2 : i64, tpu.core_type = #tpu.core_type<tc>, window_params = [{transform_indices = @transform_0, window_bounds = array<i64: 1, 8, 128>}, {transform_indices = @transform_1, window_bounds = array<i64: 1, 8, 128>}, {transform_indices = @transform_2, window_bounds = array<i64: 1, 8, 128>}, {transform_indices = @transform_3, window_bounds = array<i64: 1, 8, 128>}]} {
    %c0_i32 = arith.constant 0 : i32
    %0 = arith.cmpi eq, %arg1, %c0_i32 : i32
    %1 = arith.extui %0 : i1 to i32
    %c0_i32_0 = arith.constant 0 : i32
    %2 = arith.cmpi ne, %1, %c0_i32_0 : i32
    scf.if %2 {
      %cst = arith.constant 0.000000e+00 : f32
      %18 = vector.broadcast %cst : f32 to vector<8x128xf32>
      %c0_16 = arith.constant 0 : index
      %c0_17 = arith.constant 0 : index
      %19 = vector.load %arg6[%c0_16, %c0_17] : memref<8x128xf32, #tpu.memory_space<vmem>>, vector<8x128xf32>
      tpu.vector_store %arg6[%c0_16, %c0_17], %18 {strides = array<i32>} : memref<8x128xf32, #tpu.memory_space<vmem>>, vector<8x128xf32>,
      %cst_18 = arith.constant 0.000000e+00 : f32
      %20 = vector.broadcast %cst_18 : f32 to vector<8x128xf32>
      %c0_19 = arith.constant 0 : index
      %c0_20 = arith.constant 0 : index
      %21 = vector.load %arg7[%c0_19, %c0_20] : memref<8x128xf32, #tpu.memory_space<vmem>>, vector<8x128xf32>
      tpu.vector_store %arg7[%c0_19, %c0_20], %20 {strides = array<i32>} : memref<8x128xf32, #tpu.memory_space<vmem>>, vector<8x128xf32>,
    } else {
    }
    %c0 = arith.constant 0 : index
    %c0_1 = arith.constant 0 : index
    %c0_2 = arith.constant 0 : index
    %3 = vector.load %arg2[%c0, %c0_1, %c0_2] : memref<1x8x128xf32, #tpu.memory_space<vmem>>, vector<1x8x128xf32>
    %4 = vector.shape_cast %3 : vector<1x8x128xf32> to vector<8x128xf32>
    %c0_3 = arith.constant 0 : index
    %c0_4 = arith.constant 0 : index
    %c0_5 = arith.constant 0 : index
    %5 = vector.load %arg3[%c0_3, %c0_4, %c0_5] : memref<1x8x128xf32, #tpu.memory_space<vmem>>, vector<1x8x128xf32>
    %6 = vector.shape_cast %5 : vector<1x8x128xf32> to vector<8x128xf32>
    %c0_6 = arith.constant 0 : index
    %c0_7 = arith.constant 0 : index
    %7 = vector.load %arg6[%c0_6, %c0_7] : memref<8x128xf32, #tpu.memory_space<vmem>>, vector<8x128xf32>
    %8 = arith.mulf %4, %6 : vector<8x128xf32>
    %9 = arith.addf %7, %8 : vector<8x128xf32>
    %c0_8 = arith.constant 0 : index
    %c0_9 = arith.constant 0 : index
    %10 = vector.load %arg6[%c0_8, %c0_9] : memref<8x128xf32, #tpu.memory_space<vmem>>, vector<8x128xf32>
    tpu.vector_store %arg6[%c0_8, %c0_9], %9 {strides = array<i32>} : memref<8x128xf32, #tpu.memory_space<vmem>>, vector<8x128xf32>,
    %c0_10 = arith.constant 0 : index
    %c0_11 = arith.constant 0 : index
    %11 = vector.load %arg7[%c0_10, %c0_11] : memref<8x128xf32, #tpu.memory_space<vmem>>, vector<8x128xf32>
    %12 = arith.addf %4, %6 : vector<8x128xf32>
    %13 = arith.addf %11, %12 : vector<8x128xf32>
    %c0_12 = arith.constant 0 : index
    %c0_13 = arith.constant 0 : index
    %14 = vector.load %arg7[%c0_12, %c0_13] : memref<8x128xf32, #tpu.memory_space<vmem>>, vector<8x128xf32>
    tpu.vector_store %arg7[%c0_12, %c0_13], %13 {strides = array<i32>} : memref<8x128xf32, #tpu.memory_space<vmem>>, vector<8x128xf32>,
    %c0_i32_14 = arith.constant 0 : i32
    %15 = arith.cmpi eq, %arg1, %c0_i32_14 : i32
    %16 = arith.extui %15 : i1 to i32
    %c0_i32_15 = arith.constant 0 : i32
    %17 = arith.cmpi ne, %16, %c0_i32_15 : i32
    scf.if %17 {
      %c0_16 = arith.constant 0 : index
      %c0_17 = arith.constant 0 : index
      %18 = vector.load %arg6[%c0_16, %c0_17] : memref<8x128xf32, #tpu.memory_space<vmem>>, vector<8x128xf32>
      %19 = vector.shape_cast %18 : vector<8x128xf32> to vector<1x8x128xf32>
      %cst = arith.constant dense<0.000000e+00> : vector<1xf32>
      %20 = vector.multi_reduction <add>, %19, %cst [1, 2] : vector<1x8x128xf32> to vector<1xf32>
      %21 = vector.shape_cast %20 : vector<1xf32> to vector<1x1x1xf32>
      %22 = vector.extract %21[0, 0, 0] : f32 from vector<1x1x1xf32>
      %c0_18 = arith.constant 0 : index
      %c0_19 = arith.constant 0 : index
      %23 = vector.load %arg7[%c0_18, %c0_19] : memref<8x128xf32, #tpu.memory_space<vmem>>, vector<8x128xf32>
      %24 = vector.shape_cast %23 : vector<8x128xf32> to vector<1x8x128xf32>
      %cst_20 = arith.constant dense<0.000000e+00> : vector<1xf32>
      %25 = vector.multi_reduction <add>, %24, %cst_20 [1, 2] : vector<1x8x128xf32> to vector<1xf32>
      %26 = vector.shape_cast %25 : vector<1xf32> to vector<1x1x1xf32>
      %27 = vector.extract %26[0, 0, 0] : f32 from vector<1x1x1xf32>
      %28 = vector.broadcast %22 : f32 to vector<8x128xf32>
      %c0_21 = arith.constant 0 : index
      %c0_22 = arith.constant 0 : index
      %c0_23 = arith.constant 0 : index
      %29 = vector.load %arg4[%c0_21, %c0_22, %c0_23] : memref<1x8x128xf32, #tpu.memory_space<vmem>>, vector<1x8x128xf32>
      %30 = vector.shape_cast %29 : vector<1x8x128xf32> to vector<8x128xf32>
      %31 = vector.shape_cast %28 : vector<8x128xf32> to vector<1x8x128xf32>
      tpu.vector_store %arg4[%c0_21, %c0_22, %c0_23], %31 {strides = array<i32>} : memref<1x8x128xf32, #tpu.memory_space<vmem>>, vector<1x8x128xf32>,
      %32 = vector.broadcast %27 : f32 to vector<8x128xf32>
      %c0_24 = arith.constant 0 : index
      %c0_25 = arith.constant 0 : index
      %c0_26 = arith.constant 0 : index
      %33 = vector.load %arg5[%c0_24, %c0_25, %c0_26] : memref<1x8x128xf32, #tpu.memory_space<vmem>>, vector<1x8x128xf32>
      %34 = vector.shape_cast %33 : vector<1x8x128xf32> to vector<8x128xf32>
      %35 = vector.shape_cast %32 : vector<8x128xf32> to vector<1x8x128xf32>
      tpu.vector_store %arg5[%c0_24, %c0_25, %c0_26], %35 {strides = array<i32>} : memref<1x8x128xf32, #tpu.memory_space<vmem>>, vector<1x8x128xf32>,
    } else {
    }
    return
  }
  func.func @transform_0(%arg0: i32, %arg1: i32) -> (i32, i32, i32) {
    %c0_i32 = arith.constant 0 : i32
    %c0_i32_0 = arith.constant 0 : i32
    return %arg0, %arg1, %c0_i32 : i32, i32, i32
  }
  func.func @transform_1(%arg0: i32, %arg1: i32) -> (i32, i32, i32) {
    %c0_i32 = arith.constant 0 : i32
    %c0_i32_0 = arith.constant 0 : i32
    return %arg0, %arg1, %c0_i32 : i32, i32, i32
  }
  func.func @transform_2(%arg0: i32, %arg1: i32) -> (i32, i32, i32) {
    %c0_i32 = arith.constant 0 : i32
    %c0_i32_0 = arith.constant 0 : i32
    %c0_i32_1 = arith.constant 0 : i32
    return %arg0, %c0_i32, %c0_i32_0 : i32, i32, i32
  }
  func.func @transform_3(%arg0: i32, %arg1: i32) -> (i32, i32, i32) {
    %c0_i32 = arith.constant 0 : i32
    %c0_i32_0 = arith.constant 0 : i32
    %c0_i32_1 = arith.constant 0 : i32
    return %arg0, %c0_i32, %c0_i32_0 : i32, i32, i32
  }
}

</mosaic_0001>

<llo_original>
// kernel: dice_loss.1
$region0: #{dice_loss.1}
  #allocation0 [shape = 'u32[]', space=smem, size = 0x4, offset = 0x4, fixed_abs, tag = 'smem constant byte address 0x4 - core index']
  #allocation1 [shape = 'u32[72,128]{1,0:T(1,128)}', space=vmem, size = 0x9000, scoped, tag = 'internal scratch']
  #allocation2 [shape = 'f32[8,128]{1,0:T(8,128)}', space=vmem, size = 0x1000, scoped, tag = 'scratch operand']
  #allocation3 [shape = 'f32[8,128]{1,0:T(8,128)}', space=vmem, size = 0x1000, scoped, tag = 'scratch operand']
  %s0 = inlined_call_operand.vmem [shape: f32[2,8,128], index: 0, kind: input, shape index: {}]
  %s1 = inlined_call_operand.vmem [shape: f32[2,8,128], index: 1, kind: input, shape index: {}]
  %s2 = inlined_call_operand.vmem [shape: f32[2,8,128], index: 2, kind: output, shape index: {0}]
  %s3 = inlined_call_operand.vmem [shape: f32[2,8,128], index: 3, kind: output, shape index: {1}]
  %4 = xla_tuple %s2, %s3
  %s5 = sld [smem:[#allocation0]]
  $region57: #{dice_loss.1} parent=0
    _
  %s7 = ssub.s32 1, %s5
  %s8 = scalar_select 0, %s7, %s5
  loop: start=0, step=1, limit=4
  $region2: #{dice_loss.1} parent=0 // loop_pre_header
    _
  $region3: #{dice_loss.1} parent=0 // loop_header
    %s10 = sphi 0, %s14
    %p11 = scmp.ge.s32.totalorder %s10, 4
    %s17 = sphi 0, %s29
    %s18 = sphi 0, %s25
    %s19 = sphi 0, %s17
    %s20 = sphi 0, %s18
    %s21 = sphi 0, %s19
    %s22 = sphi 0, %s20
    %s34 = sphi 0, %s36
    %s37 = sphi 0, %s34
    %s38 = sphi 0, %s37
    %s54 = sphi 0, %s38
    %s62 = sphi 0, %s64
    %s65 = sphi 0, %s62
    %s66 = sphi 0, %s65
    %s82 = sphi 0, %s66
    %s88 = sphi 0, %s90
    %s91 = sphi 0, %s88
    %s92 = sphi 0, %s91
    %s108 = sphi 0, %s92
    %s114 = sphi 0, %s116
    %s117 = sphi 0, %s114
    %s118 = sphi 0, %s117
    %s134 = sphi 0, %s118
  $region4: #{dice_loss.1} parent=0 // loop_header_branch
    %13 = sbr.rel (%p11) target = $region8
  $region5: #{dice_loss.1} parent=0 // loop_body
    %s15 = ssub.s32 %s10, 1
    %s16 = ssub.s32 %s10, 2
    %s23 = sadd.s32 1, %s18
    %p24 = scmp.ge.s32.totalorder %s23, 1
    %s25 = scalar_select %p24, 0, %s23
    %s26 = sadd.s32 1, %s17
    %s27 = scalar_select %p24, %s26, %s17
    %p28 = scmp.ge.s32.totalorder %s27, 2
    %s29 = scalar_select %p28, 0, %s27
    %s30 = ssub.s32 %s17, %s29
    %s31 = ssub.s32 %s18, %s25
    %s32 = sor.u32 %s30, %s31
    %p33 = scmp.eq.s32.totalorder %s32, 0
    %s35 = sadd.s32 %s34, 1
    %s36 = scalar_select %p33, %s34, %s35
    %p39 = pneg %p33
    %p40 = scmp.eq.s32.totalorder %s10, 1
    %p41 = por %p39, %p40
    %p42 = scmp.ne.s32.totalorder %s34, %s37
    %p43 = scmp.eq.s32.totalorder %s10, 0
    %p44 = por %p42, %p43
    %p45 = scmp.ne.s32.totalorder %s34, %s37
    %p46 = scmp.eq.s32.totalorder %s15, 1
    %p47 = por %p45, %p46
    %p48 = scmp.ne.s32.totalorder %s37, %s38
    %p49 = scmp.eq.s32.totalorder %s15, 0
    %p50 = por %p48, %p49
    %p51 = scmp.ne.s32.totalorder %s37, %s38
    %p52 = scmp.eq.s32.totalorder %s16, 1
    %p53 = por %p51, %p52
    %p55 = scmp.ne.s32.totalorder %s38, %s54
    %p56 = scmp.eq.s32.totalorder %s16, 0
    %p57 = por %p55, %p56
    %s58 = ssub.s32 %s17, %s29
    %s59 = ssub.s32 %s18, %s25
    %s60 = sor.u32 %s58, %s59
    %p61 = scmp.eq.s32.totalorder %s60, 0
    %s63 = sadd.s32 %s62, 1
    %s64 = scalar_select %p61, %s62, %s63
    %p67 = pneg %p61
    %p68 = scmp.eq.s32.totalorder %s10, 1
    %p69 = por %p67, %p68
    %p70 = scmp.ne.s32.totalorder %s62, %s65
    %p71 = scmp.eq.s32.totalorder %s10, 0
    %p72 = por %p70, %p71
    %p73 = scmp.ne.s32.totalorder %s62, %s65
    %p74 = scmp.eq.s32.totalorder %s15, 1
    %p75 = por %p73, %p74
    %p76 = scmp.ne.s32.totalorder %s65, %s66
    %p77 = scmp.eq.s32.totalorder %s15, 0
    %p78 = por %p76, %p77
    %p79 = scmp.ne.s32.totalorder %s65, %s66
    %p80 = scmp.eq.s32.totalorder %s16, 1
    %p81 = por %p79, %p80
    %p83 = scmp.ne.s32.totalorder %s66, %s82
    %p84 = scmp.eq.s32.totalorder %s16, 0
    %p85 = por %p83, %p84
    %s86 = ssub.s32 %s17, %s29
    %p87 = scmp.eq.s32.totalorder %s86, 0
    %s89 = sadd.s32 %s88, 1
    %s90 = scalar_select %p87, %s88, %s89
    %p93 = pneg %p87
    %p94 = scmp.eq.s32.totalorder %s10, 1
    %p95 = por %p93, %p94
    %p96 = scmp.ne.s32.totalorder %s88, %s91
    %p97 = scmp.eq.s32.totalorder %s10, 0
    %p98 = por %p96, %p97
    %p99 = scmp.ne.s32.totalorder %s88, %s91
    %p100 = scmp.eq.s32.totalorder %s15, 1
    %p101 = por %p99, %p100
    %p102 = scmp.ne.s32.totalorder %s91, %s92
    %p103 = scmp.eq.s32.totalorder %s15, 0
    %p104 = por %p102, %p103
    %p105 = scmp.ne.s32.totalorder %s91, %s92
    %p106 = scmp.eq.s32.totalorder %s16, 1
    %p107 = por %p105, %p106
    %p109 = scmp.ne.s32.totalorder %s92, %s108
    %p110 = scmp.eq.s32.totalorder %s16, 0
    %p111 = por %p109, %p110
    %s112 = ssub.s32 %s17, %s29
    %p113 = scmp.eq.s32.totalorder %s112, 0
    %s115 = sadd.s32 %s114, 1
    %s116 = scalar_select %p113, %s114, %s115
    %p119 = pneg %p113
    %p120 = scmp.eq.s32.totalorder %s10, 1
    %p121 = por %p119, %p120
    %p122 = scmp.ne.s32.totalorder %s114, %s117
    %p123 = scmp.eq.s32.totalorder %s10, 0
    %p124 = por %p122, %p123
    %p125 = scmp.ne.s32.totalorder %s114, %s117
    %p126 = scmp.eq.s32.totalorder %s15, 1
    %p127 = por %p125, %p126
    %p128 = scmp.ne.s32.totalorder %s117, %s118
    %p129 = scmp.eq.s32.totalorder %s15, 0
    %p130 = por %p128, %p129
    %p131 = scmp.ne.s32.totalorder %s117, %s118
    %p132 = scmp.eq.s32.totalorder %s16, 1
    %p133 = por %p131, %p132
    %p135 = scmp.ne.s32.totalorder %s118, %s134
    %p136 = scmp.eq.s32.totalorder %s16, 0
    %p137 = por %p135, %p136
    %p138 = scmp.le.s32.totalorder 1, %s10
    %p139 = scmp.lt.s32.totalorder %s10, 3
    %p140 = pnand %p138, %p139
    %p141 = pneg %p140
    // Predicated region
    $region9: #{dice_loss.1} parent=5 // pred_check
      _
    $region10: #{dice_loss.1} parent=5 // pred_check_branch
      %143 = sbr.rel (%p140) target = $region12
    $region11: #{dice_loss.1} parent=5 // pred_region
      %s144 = ssub.s32 %s10, 1
    $region12: #{dice_loss.1} parent=5 // pred_fallthru
      _
    %p145 = scmp.lt.s32.totalorder %s10, 2
    // Predicated region
    $region13: #{dice_loss.1} parent=5 // pred_check
      %p146 = pneg %p145
    $region14: #{dice_loss.1} parent=5 // pred_check_branch
      %148 = sbr.rel (%p146) target = $region16
    $region15: #{dice_loss.1} parent=5 // pred_region
      // Predicated region
      $region17: #{dice_loss.1} parent=15 // pred_check
        %p149 = pneg %p44
      $region18: #{dice_loss.1} parent=15 // pred_check_branch
        %151 = sbr.rel (%p149) target = $region20
      $region19: #{dice_loss.1} parent=15 // pred_region
        %p152 = scmp.lt.s32.totalorder %s17, 1
        %s153 = scalar_select %p152, %s17, 1
        %p154 = scmp.lt.s32.totalorder %s18, 0
        %s155 = scalar_select %p154, %s18, 0
        %s156 = sadd.s32 %s155, %s153
        %s157 = smul.addr %s156, 8
        %s158 = scalar_lea.vmem %s0, %s157
      $region20: #{dice_loss.1} parent=15 // pred_fallthru
        _
      // Predicated region
      $region21: #{dice_loss.1} parent=15 // pred_check
        %p159 = pneg %p72
      $region22: #{dice_loss.1} parent=15 // pred_check_branch
        %161 = sbr.rel (%p159) target = $region24
      $region23: #{dice_loss.1} parent=15 // pred_region
        %p162 = scmp.lt.s32.totalorder %s17, 1
        %s163 = scalar_select %p162, %s17, 1
        %p164 = scmp.lt.s32.totalorder %s18, 0
        %s165 = scalar_select %p164, %s18, 0
        %s166 = sadd.s32 %s165, %s163
        %s167 = smul.addr %s166, 8
        %s168 = scalar_lea.vmem %s1, %s167
      $region24: #{dice_loss.1} parent=15 // pred_fallthru
        _
    $region16: #{dice_loss.1} parent=5 // pred_fallthru
      _
    %p169 = scmp.le.s32.totalorder 1, %s10
    %p170 = scmp.lt.s32.totalorder %s10, 3
    %p171 = pnand %p169, %p170
    %p172 = pneg %p171
    // Predicated region
    $region25: #{dice_loss.1} parent=5 // pred_check
      _
    $region26: #{dice_loss.1} parent=5 // pred_check_branch
      %174 = sbr.rel (%p171) target = $region28
    $region27: #{dice_loss.1} parent=5 // pred_region
      %s175 = ssub.s32 %s10, 1
      %p176 = scmp.lt.s32.totalorder %s19, 1
      %s177 = scalar_select %p176, %s19, 1
      %p178 = scmp.lt.s32.totalorder %s20, 0
      %s179 = scalar_select %p178, %s20, 0
      %s180 = sadd.s32 %s179, %s177
      %s181 = smul.addr %s180, 8
      %s182 = scalar_lea.vmem %s0, %s181
      %p183 = pneg %p50
      %p184 = pneg %p47
      %p185 = scmp.lt.s32.totalorder %s19, 1
      %s186 = scalar_select %p185, %s19, 1
      %p187 = scmp.lt.s32.totalorder %s20, 0
      %s188 = scalar_select %p187, %s20, 0
      %s189 = sadd.s32 %s188, %s186
      %s190 = smul.addr %s189, 8
      %s191 = scalar_lea.vmem %s1, %s190
      %p192 = pneg %p78
      %p193 = pneg %p75
      %p194 = pneg %p104
      %p195 = pneg %p101
      %p196 = scmp.lt.s32.totalorder %s19, 1
      %s197 = scalar_select %p196, %s19, 1
      %s198 = smul.addr %s197, 8
      %s199 = scalar_lea.vmem %s2, %s198
      %p200 = pneg %p130
      %p201 = pneg %p127
      %p202 = scmp.lt.s32.totalorder %s19, 1
      %s203 = scalar_select %p202, %s19, 1
      %s204 = smul.addr %s203, 8
      %s205 = scalar_lea.vmem %s3, %s204
      %p206 = scmp.lt.s32.totalorder %s19, 1
      %s207 = scalar_select %p206, %s19, 1
      %p208 = scmp.lt.s32.totalorder %s20, 0
      %s209 = scalar_select %p208, %s20, 0
      %s210 = sadd.s32 %s209, %s207
      %s211 = smul.addr %s210, 8
      %s212 = scalar_lea.vmem %s0, %s211
      %p213 = scmp.lt.s32.totalorder %s19, 1
      %s214 = scalar_select %p213, %s19, 1
      %p215 = scmp.lt.s32.totalorder %s20, 0
      %s216 = scalar_select %p215, %s20, 0
      %s217 = sadd.s32 %s216, %s214
      %s218 = smul.addr %s217, 8
      %s219 = scalar_lea.vmem %s1, %s218
      %p220 = scmp.lt.s32.totalorder %s19, 1
      %s221 = scalar_select %p220, %s19, 1
      %s222 = smul.addr %s221, 8
      %s223 = scalar_lea.vmem %s2, %s222
      %p224 = scmp.lt.s32.totalorder %s19, 1
      %s225 = scalar_select %p224, %s19, 1
      %s226 = smul.addr %s225, 8
      %s227 = scalar_lea.vmem %s3, %s226
      %p228 = scmp.eq.s32.totalorder %s20, 0
      // Predicated region
      $region29: #{dice_loss.1} parent=27 // pred_check
        %p229 = pneg %p228
      $region30: #{dice_loss.1} parent=27 // pred_check_branch
        %231 = sbr.rel (%p229) target = $region32
      $region31: #{dice_loss.1} parent=27 // pred_region
        %232 = vst [vmem:[#allocation2] sm:$0xff] 0.0
        %233 = vst [vmem:[#allocation3] sm:$0xff] 0.0
      $region32: #{dice_loss.1} parent=27 // pred_fallthru
        _
      %v234 = vld [vmem:[%s212] sm:$0xff]
      %v235 = vld [vmem:[%s219] sm:$0xff]
      %v236 = vld [vmem:[#allocation2] sm:$0xff]
      %v237 = vmul.f32 %v234, %v235
      %v238 = vadd.f32 %v236, %v237
      %239 = vst [vmem:[#allocation2] sm:$0xff] %v238
      %v240 = vld [vmem:[#allocation3] sm:$0xff]
      %v241 = vadd.f32 %v234, %v235
      %v242 = vadd.f32 %v240, %v241
      %243 = vst [vmem:[#allocation3] sm:$0xff] %v242
      // Predicated region
      $region33: #{dice_loss.1} parent=27 // pred_check
        %p244 = pneg %p228
      $region34: #{dice_loss.1} parent=27 // pred_check_branch
        %246 = sbr.rel (%p244) target = $region36
      $region35: #{dice_loss.1} parent=27 // pred_region
        %v247 = vld [vmem:[#allocation2] sm:$0xff]
        %248 = vadd.xlane.f32.xlu0 %v247
        %v249 = vpop.xlane.xlu0 %248
        %v250 = vrot.slane %v249, 4
        %v251 = vadd.f32 %v249, %v250
        %v252 = vrot.slane %v251, 2
        %v253 = vadd.f32 %v251, %v252
        %v254 = vrot.slane %v253, 1
        %v255 = vadd.f32 %v253, %v254
        %s256 = vtos %v255
        %v257 = vld [vmem:[#allocation3] sm:$0xff]
        %258 = vadd.xlane.f32.xlu0 %v257
        %v259 = vpop.xlane.xlu0 %258
        %v260 = vrot.slane %v259, 4
        %v261 = vadd.f32 %v259, %v260
        %v262 = vrot.slane %v261, 2
        %v263 = vadd.f32 %v261, %v262
        %v264 = vrot.slane %v263, 1
        %v265 = vadd.f32 %v263, %v264
        %s266 = vtos %v265
        %v267 = vstv %s256
        %268 = vst [vmem:[%s223] sm:$0xff] %v267
        %v269 = vstv %s266
        %270 = vst [vmem:[%s227] sm:$0xff] %v269
      $region36: #{dice_loss.1} parent=27 // pred_fallthru
        _
      %p271 = scmp.lt.s32.totalorder %s19, 1
      %s272 = scalar_select %p271, %s19, 1
      %s273 = smul.addr %s272, 8
      %s274 = scalar_lea.vmem %s2, %s273
      %p275 = scmp.lt.s32.totalorder %s19, 1
      %s276 = scalar_select %p275, %s19, 1
      %s277 = smul.addr %s276, 8
      %s278 = scalar_lea.vmem %s3, %s277
      // Predicated region
      $region37: #{dice_loss.1} parent=27 // pred_check
        %p279 = pneg %p101
      $region38: #{dice_loss.1} parent=27 // pred_check_branch
        %281 = sbr.rel (%p279) target = $region40
      $region39: #{dice_loss.1} parent=27 // pred_region
        _
      $region40: #{dice_loss.1} parent=27 // pred_fallthru
        _
      // Predicated region
      $region41: #{dice_loss.1} parent=27 // pred_check
        %p282 = pneg %p127
      $region42: #{dice_loss.1} parent=27 // pred_check_branch
        %284 = sbr.rel (%p282) target = $region44
      $region43: #{dice_loss.1} parent=27 // pred_region
        _
      $region44: #{dice_loss.1} parent=27 // pred_fallthru
        _
    $region28: #{dice_loss.1} parent=5 // pred_fallthru
      _
    %p285 = scmp.le.s32.totalorder 2, %s10
    // Predicated region
    $region45: #{dice_loss.1} parent=5 // pred_check
      %p286 = pneg %p285
    $region46: #{dice_loss.1} parent=5 // pred_check_branch
      %288 = sbr.rel (%p286) target = $region48
    $region47: #{dice_loss.1} parent=5 // pred_region
      %s289 = ssub.s32 %s10, 2
      // Predicated region
      $region49: #{dice_loss.1} parent=47 // pred_check
        %p290 = pneg %p107
      $region50: #{dice_loss.1} parent=47 // pred_check_branch
        %292 = sbr.rel (%p290) target = $region52
      $region51: #{dice_loss.1} parent=47 // pred_region
        %p293 = scmp.lt.s32.totalorder %s21, 1
        %s294 = scalar_select %p293, %s21, 1
        %s295 = smul.addr %s294, 8
        %s296 = scalar_lea.vmem %s2, %s295
      $region52: #{dice_loss.1} parent=47 // pred_fallthru
        _
      // Predicated region
      $region53: #{dice_loss.1} parent=47 // pred_check
        %p297 = pneg %p133
      $region54: #{dice_loss.1} parent=47 // pred_check_branch
        %299 = sbr.rel (%p297) target = $region56
      $region55: #{dice_loss.1} parent=47 // pred_region
        %p300 = scmp.lt.s32.totalorder %s21, 1
        %s301 = scalar_select %p300, %s21, 1
        %s302 = smul.addr %s301, 8
        %s303 = scalar_lea.vmem %s3, %s302
      $region56: #{dice_loss.1} parent=47 // pred_fallthru
        _
    $region48: #{dice_loss.1} parent=5 // pred_fallthru
      _
  $region6: #{dice_loss.1} parent=0 // loop_footer
    %s14 = sadd.s32 1, %s10
  $region7: #{dice_loss.1} parent=0 // loop_footer_branch
    %9 = sbr.rel target = $region3
  $region8: #{dice_loss.1} parent=0 // loop_exit
    _

</llo_original>
